<compile_context>
chip_gen: v5e
topology: v5e:2x2
jax: 0.10.0
libtpu: 0.0.40
codegen_flags: <defaults>
</compile_context>

<pallas_src>
import numpy as np
import jax
import jax.numpy as jnp
from jax.experimental import pallas as pl
from jax.experimental.pallas import tpu as pltpu

TRAIN_IDX_S = 100   # scaled-down stand-in for TRAIN_IDX=7931 of the big graph
LANE = 128
VMEM_LIMIT = 48 * 1024 * 1024


def _round_up(x, m):
    return ((x + m - 1) // m) * m


def _pad2d(x, rows, cols):
    r, c = x.shape
    return jnp.pad(x, ((0, rows - r), (0, cols - c)))


def _tiling(n):
    """Pick SAGEConv tiles: large tiles for HBM BW, >=256 contraction depth for
    the 256x256 MXU (v6e/v7x), and >=2 row tiles when possible so the
    'parallel' axis can split across v7x's 2 TensorCores."""
    if n >= 512:
        n_pad = _round_up(n, 512)
        tm = tk = 512
    else:
        n_pad = _round_up(n, LANE)
        tm = tk = n_pad
    if n_pad // tm < 2:
        half = (n_pad // 2 // LANE) * LANE
        if half >= LANE and n_pad % half == 0:
            tm = half            # >=2 row tiles for v7x megacore
    return tm, tk, n_pad


# ---------------- Kernel 1: tiled, fused SAGEConv ('mean' aggregator) ----------------
# out_i = relu(H_i @ W_self + (A_norm @ H)_i @ W_neigh + b)
def _sage_conv_kernel(a_ref, hk_ref, hi_ref, ws_ref, wn_ref, b_ref, o_ref,
                      acc_ref, self_ref):
    k = pl.program_id(1)

    @pl.when(k == 0)
    def _():
        acc_ref[...] = jnp.zeros_like(acc_ref)
        # self-projection hoisted to k==0 to balance the software pipeline
        self_ref[...] = jnp.dot(hi_ref[...], ws_ref[...],
                                preferred_element_type=jnp.float32)

    # A@H reduction over k tiles, f32 accumulation on bf16 operands
    acc_ref[...] += jnp.dot(a_ref[...], hk_ref[...],
                            preferred_element_type=jnp.float32)

    @pl.when(k == pl.num_programs(1) - 1)
    def _():
        out = self_ref[...] + jnp.dot(acc_ref[...].astype(jnp.bfloat16),
                                      wn_ref[...],
                                      preferred_element_type=jnp.float32)
        out = out + b_ref[...]                    # bias + ReLU in f32
        o_ref[...] = jnp.maximum(out, 0.0).astype(o_ref.dtype)


def sage_conv(a_bf16, h, w_self, w_neigh, bias, *, tm, tk,
              out_dtype=jnp.bfloat16):
    n = a_bf16.shape[0]
    d_in = h.shape[1]
    d_out = w_self.shape[1]
    grid = (n // tm, n // tk)
    return pl.pallas_call(
        _sage_conv_kernel,
        out_shape=jax.ShapeDtypeStruct((n, d_out), out_dtype),
        grid_spec=pltpu.PrefetchScalarGridSpec(
            num_scalar_prefetch=0,
            grid=grid,
            in_specs=[
                pl.BlockSpec((tm, tk), lambda i, k: (i, k)),        # A tile
                pl.BlockSpec((tk, d_in), lambda i, k: (k, 0)),      # H (reduction rows)
                pl.BlockSpec((tm, d_in), lambda i, k: (i, 0)),      # H (self rows)
                pl.BlockSpec((d_in, d_out), lambda i, k: (0, 0)),   # W_self
                pl.BlockSpec((d_in, d_out), lambda i, k: (0, 0)),   # W_neigh
                pl.BlockSpec((1, d_out), lambda i, k: (0, 0)),      # bias
            ],
            out_specs=pl.BlockSpec((tm, d_out), lambda i, k: (i, 0)),
            scratch_shapes=[pltpu.VMEM((tm, d_in), jnp.float32),    # A@H accumulator
                            pltpu.VMEM((tm, d_out), jnp.float32)],  # self projection
        ),
        compiler_params=pltpu.CompilerParams(
            dimension_semantics=("parallel", "arbitrary"),
            vmem_limit_bytes=VMEM_LIMIT,
        ),
    )(a_bf16, h, h, w_self, w_neigh, bias)


# ---------------- Kernel 2: fused get_diff + fc1 + ReLU + fc2 + sigmoid ----------------
# fc1 is linear, so W1(401,100) is split into w1_cos(1,·), w1_x4(D,·), w1_x3(D,·):
#   z = cos * w1_cos + x4 @ w1_x4 + x3 @ w1_x3 + b1   (no 401-wide intermediate)
def _head_kernel(v1_ref, v2_ref, w1c_ref, w1x4_ref, w1x3_ref, b1_ref,
                 w2_ref, b2_ref, o_ref):
    v1 = v1_ref[...].astype(jnp.float32)
    v2 = v2_ref[...].astype(jnp.float32)
    d = v1 - v2
    x3 = d * d
    x4 = v1 * v1 - v2 * v2
    dot = jnp.sum(v1 * v2, axis=1, keepdims=True)
    n1sq = jnp.sum(v1 * v1, axis=1, keepdims=True)
    n2sq = jnp.sum(v2 * v2, axis=1, keepdims=True)
    cos = dot * jax.lax.rsqrt(jnp.maximum(n1sq * n2sq, 1e-16))   # EUP rsqrt
    z = cos * w1c_ref[...] + b1_ref[...]                          # b1 folded in
    z = z + jnp.dot(x4.astype(jnp.bfloat16), w1x4_ref[...],
                    preferred_element_type=jnp.float32)
    z = z + jnp.dot(x3.astype(jnp.bfloat16), w1x3_ref[...],
                    preferred_element_type=jnp.float32)
    hfc = jnp.maximum(z, 0.0).astype(jnp.bfloat16)                # bf16 MXU path
    z2 = jnp.dot(hfc, w2_ref[...], preferred_element_type=jnp.float32) + b2_ref[...]
    o_ref[...] = jax.nn.sigmoid(z2)                               # lane-dense store


def fused_pair_head(v1, v2, w1c, w1x4, w1x3, b1, w2, b2, *, tmh):
    m = v1.shape[0]
    d_p = v1.shape[1]
    h1_p = w1x4.shape[1]
    grid = (m // tmh,)
    return pl.pallas_call(
        _head_kernel,
        out_shape=jax.ShapeDtypeStruct((m, LANE), jnp.float32),
        grid_spec=pltpu.PrefetchScalarGridSpec(
            num_scalar_prefetch=0,
            grid=grid,
            in_specs=[
                pl.BlockSpec((tmh, d_p), lambda i: (i, 0)),       # v1 rows
                pl.BlockSpec((tmh, d_p), lambda i: (i, 0)),       # v2 rows
                pl.BlockSpec((1, h1_p), lambda i: (0, 0)),        # w1_cos
                pl.BlockSpec((d_p, h1_p), lambda i: (0, 0)),      # w1_x4
                pl.BlockSpec((d_p, h1_p), lambda i: (0, 0)),      # w1_x3
                pl.BlockSpec((1, h1_p), lambda i: (0, 0)),        # b1
                pl.BlockSpec((h1_p, LANE), lambda i: (0, 0)),     # w2
                pl.BlockSpec((1, LANE), lambda i: (0, 0)),        # b2
            ],
            out_specs=pl.BlockSpec((tmh, LANE), lambda i: (i, 0)),
        ),
        compiler_params=pltpu.CompilerParams(
            dimension_semantics=("parallel",),
            vmem_limit_bytes=VMEM_LIMIT,
        ),
    )(v1, v2, w1c, w1x4, w1x3, b1, w2, b2)


# ---------------- Parameter init (deterministic, PyTorch-Linear-style) ----------------
def _linear_init(key, fan_in, fan_out):
    k1, k2 = jax.random.split(key)
    bound = 1.0 / float(np.sqrt(fan_in))
    w = jax.random.uniform(k1, (fan_in, fan_out), jnp.float32, -bound, bound)
    b = jax.random.uniform(k2, (1, fan_out), jnp.float32, -bound, bound)
    return w, b


# ---------------- host-side pair-index sampling (mirrors the torch else-branch) ----------------
def _sample_pair_indices(y_np, num_pairs_each_label, rng):
    lbs = np.unique(y_np[:TRAIN_IDX_S])
    P = num_pairs_each_label * len(lbs)
    idx0 = np.zeros((P,), np.int32)
    idx1 = np.zeros((P,), np.int32)
    idx2 = np.zeros((P,), np.int32)
    for i, lb in enumerate(lbs):
        same_pos = np.where(y_np == lb)[0]
        diff_pos = np.where(y_np != lb)[0]
        sel_same = same_pos[rng.randint(same_pos.shape[0],
                                        size=num_pairs_each_label * 2)]
        tsize = diff_pos.shape[0]
        dssize = int(num_pairs_each_label / 5)
        diffs = np.concatenate([
            rng.randint(TRAIN_IDX_S, size=dssize),
            rng.randint(TRAIN_IDX_S, tsize, size=num_pairs_each_label - dssize)])
        sel_diff = diff_pos[diffs]
        f, t = i * num_pairs_each_label, (i + 1) * num_pairs_each_label
        idx0[f:t] = sel_same[0::2]
        idx1[f:t] = sel_same[1::2]
        idx2[f:t] = sel_diff
    return idx0, idx1, idx2, P


class GraphSAGEPallas:
    def __init__(self, in_feats, n_hidden, n_embs, n_layers, key):
        # fc1: 401 -> 100 ; fc2: 100 -> 1   (401 = 1 + 2*n_embs => n_embs == 200)
        assert 2 * n_embs + 1 == 401
        dims = [(in_feats, n_hidden)]
        dims += [(n_hidden, n_hidden)] * (n_layers - 1)
        dims += [(n_hidden, n_embs)]
        keys = jax.random.split(key, len(dims) + 2)

        self.layers = []
        for (fi, fo), k in zip(dims, keys[:len(dims)]):
            k_s, k_n = jax.random.split(k)
            w_self, _ = _linear_init(k_s, fi, fo)
            w_neigh, b = _linear_init(k_n, fi, fo)
            fi_p, fo_p = _round_up(fi, LANE), _round_up(fo, LANE)
            # separate zero-padded bf16 weights (no in-kernel concat/slice needed)
            w_self_p = _pad2d(w_self, fi_p, fo_p).astype(jnp.bfloat16)
            w_neigh_p = _pad2d(w_neigh, fi_p, fo_p).astype(jnp.bfloat16)
            bias = _pad2d(b, 1, fo_p)                              # f32
            self.layers.append((w_self_p, w_neigh_p, bias, fi_p, fo_p))

        # pair-similarity head (fc1 split into cos / x4 / x3 parts, lane-padded)
        w1, b1 = _linear_init(keys[-2], 2 * n_embs + 1, 100)
        w2, b2 = _linear_init(keys[-1], 100, 1)
        d_p = _round_up(n_embs, LANE)        # 200 -> 256
        h1_p = _round_up(100, LANE)          # 100 -> 128
        self.w1_cos = _pad2d(w1[0:1, :], 1, h1_p)                              # f32
        self.w1_x4 = _pad2d(w1[1:1 + n_embs, :], d_p, h1_p).astype(jnp.bfloat16)
        self.w1_x3 = _pad2d(w1[1 + n_embs:1 + 2 * n_embs, :], d_p, h1_p).astype(jnp.bfloat16)
        self.b1 = _pad2d(b1, 1, h1_p)                                          # f32
        self.w2_pad = (jnp.zeros((h1_p, LANE), jnp.float32)
                       .at[:100, 0].set(w2[:, 0]).astype(jnp.bfloat16))
        self.b2_pad = jnp.zeros((1, LANE), jnp.float32).at[0, 0].set(b2[0, 0])

    def forward(self, a_norm, features, y_np, num_pairs_each_label, rng):
        n = a_norm.shape[0]
        tm, tk, n_pad = _tiling(n)

        # pad A / features to tile multiples; padded rows/cols are zero so they
        # never contaminate real rows through any layer.
        a_p = jnp.pad(a_norm, ((0, n_pad - n), (0, n_pad - n))).astype(jnp.bfloat16)
        fi0_p = self.layers[0][3]
        feat_p = jnp.pad(features, ((0, n_pad - n), (0, fi0_p - features.shape[1])))
        h = feat_p.astype(jnp.bfloat16)

        # --- SAGEConv stack (tiled Pallas kernel); last layer's embeddings in f32 ---
        n_layers = len(self.layers)
        for li, (w_self_p, w_neigh_p, bias, _fi_p, _fo_p) in enumerate(self.layers):
            out_dtype = jnp.float32 if li == n_layers - 1 else jnp.bfloat16
            h = sage_conv(a_p, h, w_self_p, w_neigh_p, bias,
                          tm=tm, tk=tk, out_dtype=out_dtype)

        # --- host side: only the small integer index sampling; embeddings stay on device ---
        idx0, idx1, idx2, P = _sample_pair_indices(y_np, num_pairs_each_label, rng)
        m = 2 * P
        m_pad = _round_up(m, LANE)
        if m_pad >= 512:
            m_pad = _round_up(m_pad, 512)
            tmh = 512
        else:
            tmh = m_pad
        pad = np.zeros(m_pad - m, np.int32)
        idx_a = jnp.asarray(np.concatenate([idx0, idx0, pad]))
        idx_b = jnp.asarray(np.concatenate([idx1, idx2, pad]))
        v1 = jnp.take(h, idx_a, axis=0)     # device gather of pair embeddings
        v2 = jnp.take(h, idx_b, axis=0)

        # --- fused get_diff + MLP head (gridded Pallas kernel) ---
        out_full = fused_pair_head(v1, v2, self.w1_cos, self.w1_x4, self.w1_x3,
                                   self.b1, self.w2_pad, self.b2_pad, tmh=tmh)
        out = out_full[:m, :1]

        labels_sim = jnp.concatenate(
            [jnp.ones((P, 1), jnp.float32), jnp.zeros((P, 1), jnp.float32)], axis=0)
        return out, labels_sim


if __name__ == "__main__":
    key = jax.random.PRNGKey(0)
    N, IN_FEATS, N_HIDDEN, N_EMBS, N_LAYERS, N_CLASSES = 256, 64, 128, 200, 2, 4
    NUM_PAIRS = 10

    k_feat, k_adj, k_y, k_param = jax.random.split(key, 4)

    features = jax.random.normal(k_feat, (N, IN_FEATS), jnp.float32)

    # random directed graph, no self-loops; row-normalize for 'mean' aggregation
    adj = (jax.random.uniform(k_adj, (N, N)) < 0.05).astype(jnp.float32)
    adj = adj * (1.0 - jnp.eye(N, dtype=jnp.float32))
    deg = jnp.maximum(adj.sum(axis=1, keepdims=True), 1.0)
    a_norm = adj / deg

    y = np.asarray(jax.random.randint(k_y, (N,), 0, N_CLASSES))

    model = GraphSAGEPallas(IN_FEATS, N_HIDDEN, N_EMBS, N_LAYERS, k_param)
    rng = np.random.RandomState(0)  # deterministic stand-in for np.random in the module

    out, labels_sim = model.forward(a_norm, features, y,
                                    num_pairs_each_label=NUM_PAIRS, rng=rng)
    out = jax.block_until_ready(out)
    labels_sim = jax.block_until_ready(labels_sim)

    n_lbs = len(np.unique(y[:TRAIN_IDX_S]))
    assert out.shape == (2 * NUM_PAIRS * n_lbs, 1)
    assert labels_sim.shape == out.shape
    assert bool(jnp.all((out >= 0.0) & (out <= 1.0)))
    print("KERNEL_OK")
</pallas_src>

<mosaic_0001>
module attributes {stable_mosaic.version = 11 : i64} {
  func.func @_sage_conv_kernel(%arg0: i32, %arg1: i32, %arg2: memref<128x256xbf16, #tpu.memory_space<vmem>>, %arg3: memref<256x128xbf16, #tpu.memory_space<vmem>>, %arg4: memref<128x128xbf16, #tpu.memory_space<vmem>>, %arg5: memref<128x128xbf16, #tpu.memory_space<vmem>>, %arg6: memref<128x128xbf16, #tpu.memory_space<vmem>>, %arg7: memref<1x128xf32, #tpu.memory_space<vmem>>, %arg8: memref<128x128xbf16, #tpu.memory_space<vmem>>, %arg9: memref<128x128xf32, #tpu.memory_space<vmem>>, %arg10: memref<128x128xf32, #tpu.memory_space<vmem>>) attributes {dimension_semantics = [#tpu.dimension_semantics<parallel>, #tpu.dimension_semantics<arbitrary>], iteration_bounds = array<i64: 2, 1>, scalar_prefetch = 0 : i64, scratch_operands = 2 : i64, tpu.core_type = #tpu.core_type<tc>, window_params = [{transform_indices = @transform_0, window_bounds = array<i64: 128, 256>}, {transform_indices = @transform_1, window_bounds = array<i64: 256, 128>}, {transform_indices = @transform_2, window_bounds = array<i64: 128, 128>}, {pipeline_mode = #tpu.pipeline_mode<synchronous>, transform_indices = @transform_3, window_bounds = array<i64: 128, 128>}, {pipeline_mode = #tpu.pipeline_mode<synchronous>, transform_indices = @transform_4, window_bounds = array<i64: 128, 128>}, {pipeline_mode = #tpu.pipeline_mode<synchronous>, transform_indices = @transform_5, window_bounds = array<i64: 1, 128>}, {transform_indices = @transform_6, window_bounds = array<i64: 128, 128>}]} {
    %c0_i32 = arith.constant 0 : i32
    %0 = arith.cmpi eq, %arg1, %c0_i32 : i32
    %1 = arith.extui %0 : i1 to i32
    %c0_i32_0 = arith.constant 0 : i32
    %2 = arith.cmpi ne, %1, %c0_i32_0 : i32
    scf.if %2 {
      %cst_10 = arith.constant 0.000000e+00 : f32
      %12 = vector.broadcast %cst_10 : f32 to vector<128x128xf32>
      %c0_11 = arith.constant 0 : index
      %c0_12 = arith.constant 0 : index
      %13 = vector.load %arg9[%c0_11, %c0_12] : memref<128x128xf32, #tpu.memory_space<vmem>>, vector<128x128xf32>
      tpu.vector_store %arg9[%c0_11, %c0_12], %12 {strides = array<i32>} : memref<128x128xf32, #tpu.memory_space<vmem>>, vector<128x128xf32>,
      %c0_13 = arith.constant 0 : index
      %c0_14 = arith.constant 0 : index
      %14 = vector.load %arg4[%c0_13, %c0_14] : memref<128x128xbf16, #tpu.memory_space<vmem>>, vector<128x128xbf16>
      %c0_15 = arith.constant 0 : index
      %c0_16 = arith.constant 0 : index
      %15 = vector.load %arg5[%c0_15, %c0_16] : memref<128x128xbf16, #tpu.memory_space<vmem>>, vector<128x128xbf16>
      %cst_17 = arith.constant dense<0.000000e+00> : vector<128x128xf32>
      %16 = tpu.matmul %14, %15, %cst_17 {dimension_numbers = #tpu.dot_dimension_numbers<[1], [0], [0], [1], [0, 0, 1, 1], [], []>} : vector<128x128xbf16>, vector<128x128xbf16>, vector<128x128xf32> -> vector<128x128xf32>
      %c0_18 = arith.constant 0 : index
      %c0_19 = arith.constant 0 : index
      %17 = vector.load %arg10[%c0_18, %c0_19] : memref<128x128xf32, #tpu.memory_space<vmem>>, vector<128x128xf32>
      tpu.vector_store %arg10[%c0_18, %c0_19], %16 {strides = array<i32>} : memref<128x128xf32, #tpu.memory_space<vmem>>, vector<128x128xf32>,
    } else {
    }
    %c0 = arith.constant 0 : index
    %c0_1 = arith.constant 0 : index
    %3 = vector.load %arg9[%c0, %c0_1] : memref<128x128xf32, #tpu.memory_space<vmem>>, vector<128x128xf32>
    %c0_2 = arith.constant 0 : index
    %c0_3 = arith.constant 0 : index
    %4 = vector.load %arg2[%c0_2, %c0_3] : memref<128x256xbf16, #tpu.memory_space<vmem>>, vector<128x256xbf16>
    %c0_4 = arith.constant 0 : index
    %c0_5 = arith.constant 0 : index
    %5 = vector.load %arg3[%c0_4, %c0_5] : memref<256x128xbf16, #tpu.memory_space<vmem>>, vector<256x128xbf16>
    %cst = arith.constant dense<0.000000e+00> : vector<128x128xf32>
    %6 = tpu.matmul %4, %5, %cst {dimension_numbers = #tpu.dot_dimension_numbers<[1], [0], [0], [1], [0, 0, 1, 1], [], []>} : vector<128x256xbf16>, vector<256x128xbf16>, vector<128x128xf32> -> vector<128x128xf32>
    %7 = arith.addf %3, %6 : vector<128x128xf32>
    %c0_6 = arith.constant 0 : index
    %c0_7 = arith.constant 0 : index
    %8 = vector.load %arg9[%c0_6, %c0_7] : memref<128x128xf32, #tpu.memory_space<vmem>>, vector<128x128xf32>
    tpu.vector_store %arg9[%c0_6, %c0_7], %7 {strides = array<i32>} : memref<128x128xf32, #tpu.memory_space<vmem>>, vector<128x128xf32>,
    %c0_i32_8 = arith.constant 0 : i32
    %9 = arith.cmpi eq, %arg1, %c0_i32_8 : i32
    %10 = arith.extui %9 : i1 to i32
    %c0_i32_9 = arith.constant 0 : i32
    %11 = arith.cmpi ne, %10, %c0_i32_9 : i32
    scf.if %11 {
      %c0_10 = arith.constant 0 : index
      %c0_11 = arith.constant 0 : index
      %12 = vector.load %arg10[%c0_10, %c0_11] : memref<128x128xf32, #tpu.memory_space<vmem>>, vector<128x128xf32>
      %c0_12 = arith.constant 0 : index
      %c0_13 = arith.constant 0 : index
      %13 = vector.load %arg9[%c0_12, %c0_13] : memref<128x128xf32, #tpu.memory_space<vmem>>, vector<128x128xf32>
      %14 = arith.truncf %13 : vector<128x128xf32> to vector<128x128xbf16>
      %c0_14 = arith.constant 0 : index
      %c0_15 = arith.constant 0 : index
      %15 = vector.load %arg6[%c0_14, %c0_15] : memref<128x128xbf16, #tpu.memory_space<vmem>>, vector<128x128xbf16>
      %cst_16 = arith.constant dense<0.000000e+00> : vector<128x128xf32>
      %16 = tpu.matmul %14, %15, %cst_16 {dimension_numbers = #tpu.dot_dimension_numbers<[1], [0], [0], [1], [0, 0, 1, 1], [], []>} : vector<128x128xbf16>, vector<128x128xbf16>, vector<128x128xf32> -> vector<128x128xf32>
      %17 = arith.addf %12, %16 : vector<128x128xf32>
      %c0_17 = arith.constant 0 : index
      %c0_18 = arith.constant 0 : index
      %18 = vector.load %arg7[%c0_17, %c0_18] : memref<1x128xf32, #tpu.memory_space<vmem>>, vector<1x128xf32>
      %19 = vector.broadcast %18 : vector<1x128xf32> to vector<128x128xf32>
      %20 = arith.addf %17, %19 : vector<128x128xf32>
      %cst_19 = arith.constant 0.000000e+00 : f32
      %21 = vector.broadcast %cst_19 : f32 to vector<128x128xf32>
      %22 = arith.maximumf %20, %21 : vector<128x128xf32>
      %23 = arith.truncf %22 : vector<128x128xf32> to vector<128x128xbf16>
      %c0_20 = arith.constant 0 : index
      %c0_21 = arith.constant 0 : index
      %24 = vector.load %arg8[%c0_20, %c0_21] : memref<128x128xbf16, #tpu.memory_space<vmem>>, vector<128x128xbf16>
      tpu.vector_store %arg8[%c0_20, %c0_21], %23 {strides = array<i32>} : memref<128x128xbf16, #tpu.memory_space<vmem>>, vector<128x128xbf16>,
    } else {
    }
    return
  }
  func.func @transform_0(%arg0: i32, %arg1: i32) -> (i32, i32) {
    %c0_i32 = arith.constant 0 : i32
    return %arg0, %arg1 : i32, i32
  }
  func.func @transform_1(%arg0: i32, %arg1: i32) -> (i32, i32) {
    %c0_i32 = arith.constant 0 : i32
    %c0_i32_0 = arith.constant 0 : i32
    return %arg1, %c0_i32 : i32, i32
  }
  func.func @transform_2(%arg0: i32, %arg1: i32) -> (i32, i32) {
    %c0_i32 = arith.constant 0 : i32
    %c0_i32_0 = arith.constant 0 : i32
    return %arg0, %c0_i32 : i32, i32
  }
  func.func @transform_3(%arg0: i32, %arg1: i32) -> (i32, i32) {
    %c0_i32 = arith.constant 0 : i32
    %c0_i32_0 = arith.constant 0 : i32
    %c0_i32_1 = arith.constant 0 : i32
    return %c0_i32, %c0_i32_0 : i32, i32
  }
  func.func @transform_4(%arg0: i32, %arg1: i32) -> (i32, i32) {
    %c0_i32 = arith.constant 0 : i32
    %c0_i32_0 = arith.constant 0 : i32
    %c0_i32_1 = arith.constant 0 : i32
    return %c0_i32, %c0_i32_0 : i32, i32
  }
  func.func @transform_5(%arg0: i32, %arg1: i32) -> (i32, i32) {
    %c0_i32 = arith.constant 0 : i32
    %c0_i32_0 = arith.constant 0 : i32
    %c0_i32_1 = arith.constant 0 : i32
    return %c0_i32, %c0_i32_0 : i32, i32
  }
  func.func @transform_6(%arg0: i32, %arg1: i32) -> (i32, i32) {
    %c0_i32 = arith.constant 0 : i32
    %c0_i32_0 = arith.constant 0 : i32
    return %arg0, %c0_i32 : i32, i32
  }
}

</mosaic_0001>

<llo_original>
// kernel: tpu_custom_call.1
$region0: #{tpu_custom_call.1}
  #allocation0 [shape = 'u32[]', space=smem, size = 0x4, offset = 0x4, fixed_abs, tag = 'smem constant byte address 0x4 - core index']
  #allocation1 [shape = 'u32[72,128]{1,0:T(1,128)}', space=vmem, size = 0x9000, scoped, tag = 'internal scratch']
  #allocation2 [shape = 'f32[128,128]{1,0:T(8,128)}', space=vmem, size = 0x10000, scoped, tag = 'scratch operand']
  #allocation3 [shape = 'f32[128,128]{1,0:T(8,128)}', space=vmem, size = 0x10000, scoped, tag = 'scratch operand']
  %s0 = inlined_call_operand.hbm [shape: bf16[256,256], index: 0, kind: input, shape index: {}]
  %s1 = inlined_call_operand.hbm [shape: bf16[256,128], index: 1, kind: input, shape index: {}]
  %s2 = inlined_call_operand.hbm [shape: bf16[256,128], index: 2, kind: input, shape index: {}]
  %s3 = inlined_call_operand.hbm [shape: bf16[128,128], index: 3, kind: input, shape index: {}]
  %s4 = inlined_call_operand.hbm [shape: bf16[128,128], index: 4, kind: input, shape index: {}]
  %s5 = inlined_call_operand.vmem [shape: f32[1,128], index: 5, kind: input, shape index: {}]
  %s6 = inlined_call_operand.hbm [shape: bf16[256,128], index: 6, kind: output, shape index: {}]
  %s7 = sld [smem:[#allocation0]]
  $region85: #{tpu_custom_call.1} parent=0
    _
  %s9 = ssub.s32 1, %s7
  %s10 = scalar_select 0, %s9, %s7
  $region1: #{tpu_custom_call.1} parent=0
    #allocation4 [shape = 'u8[131072]{0}', space=vmem, size = 0x20000, scoped, tag = 'input window, operand 0']
    #allocation5 [shape = 's32[2]{0}', space=sflag, size = 0x8, scoped, tag = 'scoped memory for tpu_custom_call.1']
    #allocation6 [shape = 's32[2]{0}', space=sflag, size = 0x8, scoped, tag = 'scoped memory for tpu_custom_call.1']
    #allocation7 [shape = 'u8[65536]{0}', space=vmem, size = 0x10000, scoped, tag = 'input window, operand 1, single buffered']
    #allocation8 [shape = 's32[1]{0}', space=sflag, size = 0x4, scoped, tag = 'scoped memory for tpu_custom_call.1']
    #allocation9 [shape = 'u8[65536]{0}', space=vmem, size = 0x10000, scoped, tag = 'input window, operand 2']
    #allocation10 [shape = 'u8[32768]{0}', space=vmem, size = 0x8000, scoped, tag = 'input window, operand 3, single buffered']
    #allocation11 [shape = 'u8[32768]{0}', space=vmem, size = 0x8000, scoped, tag = 'input window, operand 4, single buffered']
    #allocation12 [shape = 's32[1]{0}', space=sflag, size = 0x4, scoped, tag = 'scoped memory for tpu_custom_call.1']
    #allocation13 [shape = 'u8[65536]{0}', space=vmem, size = 0x10000, scoped, tag = 'output window, operand 0']
    %11 = vsyncpa [#allocation5], 0
    %s12 = scalar_lea.sflag [#allocation5], 1
    %13 = vsyncpa %s12, 0
    %14 = vsyncpa [#allocation8], 0
    %15 = vsyncpa [#allocation12], 0
    %16 = vsyncpa [#allocation6], 0
    %s17 = scalar_lea.sflag [#allocation6], 1
    %18 = vsyncpa %s17, 0
    loop: start=0, step=1, limit=4
    $region2: #{tpu_custom_call.1} parent=1 // loop_pre_header
      _
    $region3: #{tpu_custom_call.1} parent=1 // loop_header
      %s20 = sphi 0, %s24
      %p21 = scmp.ge.s32.totalorder %s20, 4
      %s27 = sphi 0, %s39
      %s28 = sphi 0, %s35
      %s29 = sphi 0, %s27
      %s30 = sphi 0, %s28
      %s31 = sphi 0, %s29
      %s32 = sphi 0, %s30
      %s44 = sphi 0, %s46
      %s47 = sphi 0, %s44
      %s48 = sphi 0, %s47
      %s64 = sphi 0, %s48
      %s70 = sphi 0, %s72
      %s73 = sphi 0, %s70
      %s74 = sphi 0, %s73
      %s90 = sphi 0, %s74
      %s96 = sphi 0, %s98
      %s99 = sphi 0, %s96
      %s100 = sphi 0, %s99
      %s116 = sphi 0, %s100
      %s120 = sphi 0, %s120
      %s122 = sphi 0, %s120
      %s123 = sphi 0, %s122
      %s137 = sphi 0, %s123
      %s141 = sphi 0, %s141
      %s143 = sphi 0, %s141
      %s144 = sphi 0, %s143
      %s158 = sphi 0, %s144
      %s162 = sphi 0, %s162
      %s164 = sphi 0, %s162
      %s165 = sphi 0, %s164
      %s179 = sphi 0, %s165
      %s185 = sphi 0, %s187
      %s188 = sphi 0, %s185
      %s189 = sphi 0, %s188
      %s205 = sphi 0, %s189
    $region4: #{tpu_custom_call.1} parent=1 // loop_header_branch
      %23 = sbr.rel (%p21) target = $region8
    $region5: #{tpu_custom_call.1} parent=1 // loop_body
      %s25 = ssub.s32 %s20, 1
      %s26 = ssub.s32 %s20, 2
      %s33 = sadd.s32 1, %s28
      %p34 = scmp.ge.s32.totalorder %s33, 1
      %s35 = scalar_select %p34, 0, %s33
      %s36 = sadd.s32 1, %s27
      %s37 = scalar_select %p34, %s36, %s27
      %p38 = scmp.ge.s32.totalorder %s37, 2
      %s39 = scalar_select %p38, 0, %s37
      %s40 = ssub.s32 %s27, %s39
      %s41 = ssub.s32 %s28, %s35
      %s42 = sor.u32 %s40, %s41
      %p43 = scmp.eq.s32.totalorder %s42, 0
      %s45 = sadd.s32 %s44, 1
      %s46 = scalar_select %p43, %s44, %s45
      %p49 = pneg %p43
      %p50 = scmp.eq.s32.totalorder %s20, 1
      %p51 = por %p49, %p50
      %p52 = scmp.ne.s32.totalorder %s44, %s47
      %p53 = scmp.eq.s32.totalorder %s20, 0
      %p54 = por %p52, %p53
      %p55 = scmp.ne.s32.totalorder %s44, %s47
      %p56 = scmp.eq.s32.totalorder %s25, 1
      %p57 = por %p55, %p56
      %p58 = scmp.ne.s32.totalorder %s47, %s48
      %p59 = scmp.eq.s32.totalorder %s25, 0
      %p60 = por %p58, %p59
      %p61 = scmp.ne.s32.totalorder %s47, %s48
      %p62 = scmp.eq.s32.totalorder %s26, 1
      %p63 = por %p61, %p62
      %p65 = scmp.ne.s32.totalorder %s48, %s64
      %p66 = scmp.eq.s32.totalorder %s26, 0
      %p67 = por %p65, %p66
      %s68 = ssub.s32 %s28, %s35
      %p69 = scmp.eq.s32.totalorder %s68, 0
      %s71 = sadd.s32 %s70, 1
      %s72 = scalar_select %p69, %s70, %s71
      %p75 = pneg %p69
      %p76 = scmp.eq.s32.totalorder %s20, 1
      %p77 = por %p75, %p76
      %p78 = scmp.ne.s32.totalorder %s70, %s73
      %p79 = scmp.eq.s32.totalorder %s20, 0
      %p80 = por %p78, %p79
      %p81 = scmp.ne.s32.totalorder %s70, %s73
      %p82 = scmp.eq.s32.totalorder %s25, 1
      %p83 = por %p81, %p82
      %p84 = scmp.ne.s32.totalorder %s73, %s74
      %p85 = scmp.eq.s32.totalorder %s25, 0
      %p86 = por %p84, %p85
      %p87 = scmp.ne.s32.totalorder %s73, %s74
      %p88 = scmp.eq.s32.totalorder %s26, 1
      %p89 = por %p87, %p88
      %p91 = scmp.ne.s32.totalorder %s74, %s90
      %p92 = scmp.eq.s32.totalorder %s26, 0
      %p93 = por %p91, %p92
      %s94 = ssub.s32 %s27, %s39
      %p95 = scmp.eq.s32.totalorder %s94, 0
      %s97 = sadd.s32 %s96, 1
      %s98 = scalar_select %p95, %s96, %s97
      %p101 = pneg %p95
      %p102 = scmp.eq.s32.totalorder %s20, 1
      %p103 = por %p101, %p102
      %p104 = scmp.ne.s32.totalorder %s96, %s99
      %p105 = scmp.eq.s32.totalorder %s20, 0
      %p106 = por %p104, %p105
      %p107 = scmp.ne.s32.totalorder %s96, %s99
      %p108 = scmp.eq.s32.totalorder %s25, 1
      %p109 = por %p107, %p108
      %p110 = scmp.ne.s32.totalorder %s99, %s100
      %p111 = scmp.eq.s32.totalorder %s25, 0
      %p112 = por %p110, %p111
      %p113 = scmp.ne.s32.totalorder %s99, %s100
      %p114 = scmp.eq.s32.totalorder %s26, 1
      %p115 = por %p113, %p114
      %p117 = scmp.ne.s32.totalorder %s100, %s116
      %p118 = scmp.eq.s32.totalorder %s26, 0
      %p119 = por %p117, %p118
      %s121 = sadd.s32 %s120, 1
      %p124 = scmp.eq.s32.totalorder %s20, 1
      %p125 = scmp.ne.s32.totalorder %s120, %s122
      %p126 = scmp.eq.s32.totalorder %s20, 0
      %p127 = por %p125, %p126
      %p128 = scmp.ne.s32.totalorder %s120, %s122
      %p129 = scmp.eq.s32.totalorder %s25, 1
      %p130 = por %p128, %p129
      %p131 = scmp.ne.s32.totalorder %s122, %s123
      %p132 = scmp.eq.s32.totalorder %s25, 0
      %p133 = por %p131, %p132
      %p134 = scmp.ne.s32.totalorder %s122, %s123
      %p135 = scmp.eq.s32.totalorder %s26, 1
      %p136 = por %p134, %p135
      %p138 = scmp.ne.s32.totalorder %s123, %s137
      %p139 = scmp.eq.s32.totalorder %s26, 0
      %p140 = por %p138, %p139
      %s142 = sadd.s32 %s141, 1
      %p145 = scmp.eq.s32.totalorder %s20, 1
      %p146 = scmp.ne.s32.totalorder %s141, %s143
      %p147 = scmp.eq.s32.totalorder %s20, 0
      %p148 = por %p146, %p147
      %p149 = scmp.ne.s32.totalorder %s141, %s143
      %p150 = scmp.eq.s32.totalorder %s25, 1
      %p151 = por %p149, %p150
      %p152 = scmp.ne.s32.totalorder %s143, %s144
      %p153 = scmp.eq.s32.totalorder %s25, 0
      %p154 = por %p152, %p153
      %p155 = scmp.ne.s32.totalorder %s143, %s144
      %p156 = scmp.eq.s32.totalorder %s26, 1
      %p157 = por %p155, %p156
      %p159 = scmp.ne.s32.totalorder %s144, %s158
      %p160 = scmp.eq.s32.totalorder %s26, 0
      %p161 = por %p159, %p160
      %s163 = sadd.s32 %s162, 1
      %p166 = scmp.eq.s32.totalorder %s20, 1
      %p167 = scmp.ne.s32.totalorder %s162, %s164
      %p168 = scmp.eq.s32.totalorder %s20, 0
      %p169 = por %p167, %p168
      %p170 = scmp.ne.s32.totalorder %s162, %s164
      %p171 = scmp.eq.s32.totalorder %s25, 1
      %p172 = por %p170, %p171
      %p173 = scmp.ne.s32.totalorder %s164, %s165
      %p174 = scmp.eq.s32.totalorder %s25, 0
      %p175 = por %p173, %p174
      %p176 = scmp.ne.s32.totalorder %s164, %s165
      %p177 = scmp.eq.s32.totalorder %s26, 1
      %p178 = por %p176, %p177
      %p180 = scmp.ne.s32.totalorder %s165, %s179
      %p181 = scmp.eq.s32.totalorder %s26, 0
      %p182 = por %p180, %p181
      %s183 = ssub.s32 %s27, %s39
      %p184 = scmp.eq.s32.totalorder %s183, 0
      %s186 = sadd.s32 %s185, 1
      %s187 = scalar_select %p184, %s185, %s186
      %p190 = pneg %p184
      %p191 = scmp.eq.s32.totalorder %s20, 1
      %p192 = por %p190, %p191
      %p193 = scmp.ne.s32.totalorder %s185, %s188
      %p194 = scmp.eq.s32.totalorder %s20, 0
      %p195 = por %p193, %p194
      %p196 = scmp.ne.s32.totalorder %s185, %s188
      %p197 = scmp.eq.s32.totalorder %s25, 1
      %p198 = por %p196, %p197
      %p199 = scmp.ne.s32.totalorder %s188, %s189
      %p200 = scmp.eq.s32.totalorder %s25, 0
      %p201 = por %p199, %p200
      %p202 = scmp.ne.s32.totalorder %s188, %s189
      %p203 = scmp.eq.s32.totalorder %s26, 1
      %p204 = por %p202, %p203
      %p206 = scmp.ne.s32.totalorder %s189, %s205
      %p207 = scmp.eq.s32.totalorder %s26, 0
      %p208 = por %p206, %p207
      %p209 = scmp.le.s32.totalorder 1, %s20
      %p210 = scmp.lt.s32.totalorder %s20, 3
      %p211 = pnand %p209, %p210
      %p212 = pneg %p211
      // Predicated region
      $region9: #{tpu_custom_call.1} parent=5 // pred_check
        _
      $region10: #{tpu_custom_call.1} parent=5 // pred_check_branch
        %214 = sbr.rel (%p211) target = $region12
      $region11: #{tpu_custom_call.1} parent=5 // pred_region
        %s215 = ssub.s32 %s20, 1
        // Predicated region
        $region13: #{tpu_custom_call.1} parent=11 // pred_check
          %p216 = pneg %p86
        $region14: #{tpu_custom_call.1} parent=11 // pred_check_branch
          %218 = sbr.rel (%p216) target = $region16
        $region15: #{tpu_custom_call.1} parent=11 // pred_region
          %s219 = smul.u32 32, %s30
          %221 = vsyncadd [#allocation8], 0
          %s222 = smul.addr %s219, 4
          %s223 = scalar_lea.hbm %s1, %s222
          %s224 = sshll.u32 %s223, 4
          %s225 = int_to_ptr.hbm [resolvable:$true] %s224
          %s226 = sshll.u32 [#allocation7], 4
          %s227 = int_to_ptr.vmem [resolvable:$true] %s226
          %232 = dma.hbm_to_vmem [thread:$0]  %s225, 2048, %s227, [#allocation8], 64, 64, 4
        $region16: #{tpu_custom_call.1} parent=11 // pred_fallthru
          _
        // Predicated region
        $region17: #{tpu_custom_call.1} parent=11 // pred_check
          %p233 = pneg %p133
        $region18: #{tpu_custom_call.1} parent=11 // pred_check_branch
          %235 = sbr.rel (%p233) target = $region20
        $region19: #{tpu_custom_call.1} parent=11 // pred_region
          %237 = vsyncadd [#allocation8], 0
          %s238 = sshll.u32 %s3, 4
          %s239 = int_to_ptr.hbm [resolvable:$true] %s238
          %s240 = sshll.u32 [#allocation10], 4
          %s241 = int_to_ptr.vmem [resolvable:$true] %s240
          %246 = dma.hbm_to_vmem [thread:$0]  %s239, 1024, %s241, [#allocation8], 64, 64, 4
        $region20: #{tpu_custom_call.1} parent=11 // pred_fallthru
          _
        // Predicated region
        $region21: #{tpu_custom_call.1} parent=11 // pred_check
          %p247 = pneg %p154
        $region22: #{tpu_custom_call.1} parent=11 // pred_check_branch
          %249 = sbr.rel (%p247) target = $region24
        $region23: #{tpu_custom_call.1} parent=11 // pred_region
          %251 = vsyncadd [#allocation12], 0
          %s252 = sshll.u32 %s4, 4
          %s253 = int_to_ptr.hbm [resolvable:$true] %s252
          %s254 = sshll.u32 [#allocation11], 4
          %s255 = int_to_ptr.vmem [resolvable:$true] %s254
          %260 = dma.hbm_to_vmem [thread:$0]  %s253, 1024, %s255, [#allocation12], 64, 64, 4
        $region24: #{tpu_custom_call.1} parent=11 // pred_fallthru
          _
        // Predicated region
        $region25: #{tpu_custom_call.1} parent=11 // pred_check
          %p261 = pneg %p175
        $region26: #{tpu_custom_call.1} parent=11 // pred_check_branch
          %263 = sbr.rel (%p261) target = $region28
        $region27: #{tpu_custom_call.1} parent=11 // pred_region
          _
        $region28: #{tpu_custom_call.1} parent=11 // pred_fallthru
          _
      $region12: #{tpu_custom_call.1} parent=5 // pred_fallthru
        _
      %p264 = scmp.lt.s32.totalorder %s20, 2
      // Predicated region
      $region29: #{tpu_custom_call.1} parent=5 // pred_check
        %p265 = pneg %p264
      $region30: #{tpu_custom_call.1} parent=5 // pred_check_branch
        %267 = sbr.rel (%p265) target = $region32
      $region31: #{tpu_custom_call.1} parent=5 // pred_region
        // Predicated region
        $region33: #{tpu_custom_call.1} parent=31 // pred_check
          %p268 = pneg %p54
        $region34: #{tpu_custom_call.1} parent=31 // pred_check_branch
          %270 = sbr.rel (%p268) target = $region36
        $region35: #{tpu_custom_call.1} parent=31 // pred_region
          %s271 = sand.u32 %s20, 1
          %s272 = scalar_lea.sflag [#allocation5], %s271
          %s273 = sand.u32 %s44, 1
          %s274 = smul.addr %s273, 128
          %s275 = scalar_lea.vmem [#allocation4], %s274
          %s276 = smul.u32 16, %s27
          %s277 = smul.u32 2, %s28
          %279 = vsyncadd %s272, 0
          %s280 = smul.addr %s276, 2
          %s281 = sadd.s32 %s277, %s280
          %s282 = smul.addr %s281, 4
          %s283 = scalar_lea.hbm %s0, %s282
          %s284 = sshll.u32 %s283, 4
          %s285 = int_to_ptr.hbm [resolvable:$true] %s284
          %s286 = sshll.u32 %s275, 4
          %s287 = int_to_ptr.vmem [resolvable:$true] %s286
          %292 = dma.hbm_to_vmem [thread:$0]  %s285, 2048, %s287, %s272, 128, 128, 8
        $region36: #{tpu_custom_call.1} parent=31 // pred_fallthru
          _
        // Predicated region
        $region37: #{tpu_custom_call.1} parent=31 // pred_check
          %p293 = pneg %p106
        $region38: #{tpu_custom_call.1} parent=31 // pred_check_branch
          %295 = sbr.rel (%p293) target = $region40
        $region39: #{tpu_custom_call.1} parent=31 // pred_region
          %s296 = sand.u32 %s20, 1
          %s297 = scalar_lea.sflag [#allocation5], %s296
          %s298 = sand.u32 %s96, 1
          %s299 = smul.addr %s298, 64
          %s300 = scalar_lea.vmem [#allocation9], %s299
          %s301 = smul.u32 16, %s27
          %303 = vsyncadd %s297, 0
          %s304 = smul.addr %s301, 4
          %s305 = scalar_lea.hbm %s2, %s304
          %s306 = sshll.u32 %s305, 4
          %s307 = int_to_ptr.hbm [resolvable:$true] %s306
          %s308 = sshll.u32 %s300, 4
          %s309 = int_to_ptr.vmem [resolvable:$true] %s308
          %314 = dma.hbm_to_vmem [thread:$0]  %s307, 1024, %s309, %s297, 64, 64, 4
        $region40: #{tpu_custom_call.1} parent=31 // pred_fallthru
          _
      $region32: #{tpu_custom_call.1} parent=5 // pred_fallthru
        _
      %p315 = scmp.le.s32.totalorder 1, %s20
      %p316 = scmp.lt.s32.totalorder %s20, 3
      %p317 = pnand %p315, %p316
      %p318 = pneg %p317
      // Predicated region
      $region41: #{tpu_custom_call.1} parent=5 // pred_check
        _
      $region42: #{tpu_custom_call.1} parent=5 // pred_check_branch
        %320 = sbr.rel (%p317) target = $region44
      $region43: #{tpu_custom_call.1} parent=5 // pred_region
        %s321 = ssub.s32 %s20, 1
        %s322 = sand.u32 %s25, 1
        %s323 = scalar_lea.sflag [#allocation5], %s322
        %s324 = sand.u32 %s47, 1
        %s325 = smul.addr %s324, 128
        %s326 = scalar_lea.vmem [#allocation4], %s325
        // Predicated region
        $region45: #{tpu_custom_call.1} parent=43 // pred_check
          %p327 = pneg %p60
        $region46: #{tpu_custom_call.1} parent=43 // pred_check_branch
          %329 = sbr.rel (%p327) target = $region48
        $region47: #{tpu_custom_call.1} parent=43 // pred_region
          %331 = dma.done %s323, 2048
        $region48: #{tpu_custom_call.1} parent=43 // pred_fallthru
          _
        // Predicated region
        $region49: #{tpu_custom_call.1} parent=43 // pred_check
          %p332 = pneg %p86
        $region50: #{tpu_custom_call.1} parent=43 // pred_check_branch
          %334 = sbr.rel (%p332) target = $region52
        $region51: #{tpu_custom_call.1} parent=43 // pred_region
          %336 = dma.done [#allocation8], 2048
        $region52: #{tpu_custom_call.1} parent=43 // pred_fallthru
          _
        %s337 = sand.u32 %s25, 1
        %s338 = scalar_lea.sflag [#allocation5], %s337
        %s339 = sand.u32 %s99, 1
        %s340 = smul.addr %s339, 64
        %s341 = scalar_lea.vmem [#allocation9], %s340
        // Predicated region
        $region53: #{tpu_custom_call.1} parent=43 // pred_check
          %p342 = pneg %p112
        $region54: #{tpu_custom_call.1} parent=43 // pred_check_branch
          %344 = sbr.rel (%p342) target = $region56
        $region55: #{tpu_custom_call.1} parent=43 // pred_region
          %346 = dma.done %s338, 1024
        $region56: #{tpu_custom_call.1} parent=43 // pred_fallthru
          _
        // Predicated region
        $region57: #{tpu_custom_call.1} parent=43 // pred_check
          %p347 = pneg %p133
        $region58: #{tpu_custom_call.1} parent=43 // pred_check_branch
          %349 = sbr.rel (%p347) target = $region60
        $region59: #{tpu_custom_call.1} parent=43 // pred_region
          %351 = dma.done [#allocation8], 1024
        $region60: #{tpu_custom_call.1} parent=43 // pred_fallthru
          _
        // Predicated region
        $region61: #{tpu_custom_call.1} parent=43 // pred_check
          %p352 = pneg %p154
        $region62: #{tpu_custom_call.1} parent=43 // pred_check_branch
          %354 = sbr.rel (%p352) target = $region64
        $region63: #{tpu_custom_call.1} parent=43 // pred_region
          %356 = dma.done [#allocation12], 1024
        $region64: #{tpu_custom_call.1} parent=43 // pred_fallthru
          _
        %s357 = sand.u32 %s25, 1
        %s358 = scalar_lea.sflag [#allocation5], %s357
        %s359 = sand.u32 %s47, 1
        %s360 = smul.addr %s359, 128
        %s361 = scalar_lea.vmem [#allocation4], %s360
        %p362 = pneg %p60
        %p363 = pneg %p57
        %p364 = pneg %p86
        %p365 = pneg %p83
        %s366 = sand.u32 %s25, 1
        %s367 = scalar_lea.sflag [#allocation5], %s366
        %s368 = sand.u32 %s99, 1
        %s369 = smul.addr %s368, 64
        %s370 = scalar_lea.vmem [#allocation9], %s369
        %p371 = pneg %p112
        %p372 = pneg %p109
        %p373 = pneg %p133
        %p374 = pneg %p130
        %p375 = pneg %p154
        %p376 = pneg %p151
        %p377 = pneg %p175
        %p378 = pneg %p172
        %p379 = pneg %p201
        %p380 = pneg %p198
        %s381 = sand.u32 %s188, 1
        %s382 = scalar_lea.sflag [#allocation6], %s381
        %s383 = sand.u32 %s188, 1
        %s384 = smul.addr %s383, 64
        %s385 = scalar_lea.vmem [#allocation13], %s384
        %s386 = smul.u32 16, %s29
        %s387 = smul.u32 2, %s30
        %s388 = smul.u32 32, %s30
        %s389 = smul.u32 16, %s29
        %s390 = smul.u32 16, %s29
        %p391 = scmp.eq.s32.totalorder %s30, 0
        // Predicated region
        $region65: #{tpu_custom_call.1} parent=43 // pred_check
          %p392 = pneg %p391
        $region66: #{tpu_custom_call.1} parent=43 // pred_check_branch
          %394 = sbr.rel (%p392) target = $region68
        $region67: #{tpu_custom_call.1} parent=43 // pred_region
          %395 = vst [vmem:[#allocation2] sm:$0xff] 0.0
          %396 = vst [vmem:[#allocation2 + $0x8] sm:$0xff] 0.0
          %397 = vst [vmem:[#allocation2 + $0x10] sm:$0xff] 0.0
          %398 = vst [vmem:[#allocation2 + $0x18] sm:$0xff] 0.0
          %399 = vst [vmem:[#allocation2 + $0x20] sm:$0xff] 0.0
          %400 = vst [vmem:[#allocation2 + $0x28] sm:$0xff] 0.0
          %401 = vst [vmem:[#allocation2 + $0x30] sm:$0xff] 0.0
          %402 = vst [vmem:[#allocation2 + $0x38] sm:$0xff] 0.0
          %403 = vst [vmem:[#allocation2 + $0x40] sm:$0xff] 0.0
          %404 = vst [vmem:[#allocation2 + $0x48] sm:$0xff] 0.0
          %405 = vst [vmem:[#allocation2 + $0x50] sm:$0xff] 0.0
          %406 = vst [vmem:[#allocation2 + $0x58] sm:$0xff] 0.0
          %407 = vst [vmem:[#allocation2 + $0x60] sm:$0xff] 0.0
          %408 = vst [vmem:[#allocation2 + $0x68] sm:$0xff] 0.0
          %409 = vst [vmem:[#allocation2 + $0x70] sm:$0xff] 0.0
          %410 = vst [vmem:[#allocation2 + $0x78] sm:$0xff] 0.0
          %v411 = vld [vmem:[%s341] sm:$0xf]
          %v412 = vld [vmem:[%s341 + $0x4] sm:$0xf]
          %v413 = vld [vmem:[%s341 + $0x8] sm:$0xf]
          %v414 = vld [vmem:[%s341 + $0xc] sm:$0xf]
          %v415 = vld [vmem:[%s341 + $0x10] sm:$0xf]
          %v416 = vld [vmem:[%s341 + $0x14] sm:$0xf]
          %v417 = vld [vmem:[%s341 + $0x18] sm:$0xf]
          %v418 = vld [vmem:[%s341 + $0x1c] sm:$0xf]
          %v419 = vld [vmem:[%s341 + $0x20] sm:$0xf]
          %v420 = vld [vmem:[%s341 + $0x24] sm:$0xf]
          %v421 = vld [vmem:[%s341 + $0x28] sm:$0xf]
          %v422 = vld [vmem:[%s341 + $0x2c] sm:$0xf]
          %v423 = vld [vmem:[%s341 + $0x30] sm:$0xf]
          %v424 = vld [vmem:[%s341 + $0x34] sm:$0xf]
          %v425 = vld [vmem:[%s341 + $0x38] sm:$0xf]
          %v426 = vld [vmem:[%s341 + $0x3c] sm:$0xf]
          %v427 = vld [vmem:[#allocation10] sm:$0xf]
          %v428 = vld [vmem:[#allocation10 + $0x4] sm:$0xf]
          %v429 = vld [vmem:[#allocation10 + $0x8] sm:$0xf]
          %v430 = vld [vmem:[#allocation10 + $0xc] sm:$0xf]
          %v431 = vld [vmem:[#allocation10 + $0x10] sm:$0xf]
          %v432 = vld [vmem:[#allocation10 + $0x14] sm:$0xf]
          %v433 = vld [vmem:[#allocation10 + $0x18] sm:$0xf]
          %v434 = vld [vmem:[#allocation10 + $0x1c] sm:$0xf]
          %v435 = vld [vmem:[#allocation10 + $0x20] sm:$0xf]
          %v436 = vld [vmem:[#allocation10 + $0x24] sm:$0xf]
          %v437 = vld [vmem:[#allocation10 + $0x28] sm:$0xf]
          %v438 = vld [vmem:[#allocation10 + $0x2c] sm:$0xf]
          %v439 = vld [vmem:[#allocation10 + $0x30] sm:$0xf]
          %v440 = vld [vmem:[#allocation10 + $0x34] sm:$0xf]
          %v441 = vld [vmem:[#allocation10 + $0x38] sm:$0xf]
          %v442 = vld [vmem:[#allocation10 + $0x3c] sm:$0xf]
          %v459 = vunpack.c.l.b16 %v411
          %v460 = vunpack.c.l.b16 %v412
          %v461 = vunpack.c.l.b16 %v413
          %v462 = vunpack.c.l.b16 %v414
          %v463 = vunpack.c.l.b16 %v415
          %v464 = vunpack.c.l.b16 %v416
          %v465 = vunpack.c.l.b16 %v417
          %v466 = vunpack.c.l.b16 %v418
          %v467 = vunpack.c.l.b16 %v419
          %v468 = vunpack.c.l.b16 %v420
          %v469 = vunpack.c.l.b16 %v421
          %v470 = vunpack.c.l.b16 %v422
          %v471 = vunpack.c.l.b16 %v423
          %v472 = vunpack.c.l.b16 %v424
          %v473 = vunpack.c.l.b16 %v425
          %v474 = vunpack.c.l.b16 %v426
          %v475 = vpack.c.b16 %v460, %v459
          %v476 = vpack.c.b16 %v462, %v461
          %v477 = vpack.c.b16 %v464, %v463
          %v478 = vpack.c.b16 %v466, %v465
          %v479 = vpack.c.b16 %v468, %v467
          %v480 = vpack.c.b16 %v470, %v469
          %v481 = vpack.c.b16 %v472, %v471
          %v482 = vpack.c.b16 %v474, %v473
          %v507 = vunpack.c.l.b16 %v427
          %v508 = vunpack.c.l.b16 %v428
          %v509 = vunpack.c.l.b16 %v429
          %v510 = vunpack.c.l.b16 %v430
          %v511 = vunpack.c.l.b16 %v431
          %v512 = vunpack.c.l.b16 %v432
          %v513 = vunpack.c.l.b16 %v433
          %v514 = vunpack.c.l.b16 %v434
          %v515 = vunpack.c.l.b16 %v435
          %v516 = vunpack.c.l.b16 %v436
          %v517 = vunpack.c.l.b16 %v437
          %v518 = vunpack.c.l.b16 %v438
          %v519 = vunpack.c.l.b16 %v439
          %v520 = vunpack.c.l.b16 %v440
          %v521 = vunpack.c.l.b16 %v441
          %v522 = vunpack.c.l.b16 %v442
          %v523 = vpack.c.b16 %v508, %v507
          %v524 = vpack.c.b16 %v510, %v509
          %v525 = vpack.c.b16 %v512, %v511
          %v526 = vpack.c.b16 %v514, %v513
          %v527 = vpack.c.b16 %v516, %v515
          %v528 = vpack.c.b16 %v518, %v517
          %v529 = vpack.c.b16 %v520, %v519
          %v530 = vpack.c.b16 %v522, %v521
          %539 = vmatpush.bf16.msra.mxu0 %v530
          %540 = vmatpush.bf16.msra.mxu0 %v529
          %541 = vmatpush.bf16.msra.mxu0 %v528
          %542 = vmatpush.bf16.msra.mxu0 %v527
          %543 = vmatpush.bf16.msra.mxu0 %v526
          %544 = vmatpush.bf16.msra.mxu0 %v525
          %545 = vmatpush.bf16.msra.mxu0 %v524
          %546 = vmatpush.bf16.msra.mxu0 %v523
          %547 = vmatmul.bf16.gmra.mxu0 %v475
          %v548 = vpop.f32.mrf.mxu0
          %v549 = vadd.f32 0.0, %v548
          %v550 = vpop.f32.mrf.mxu0
          %v551 = vadd.f32 0.0, %v550
          %552 = vmatmul.bf16.gmra.mxu0 %v476
          %v553 = vpop.f32.mrf.mxu0
          %v554 = vadd.f32 0.0, %v553
          %v555 = vpop.f32.mrf.mxu0
          %v556 = vadd.f32 0.0, %v555
          %557 = vmatmul.bf16.gmra.mxu0 %v477
          %v558 = vpop.f32.mrf.mxu0
          %v559 = vadd.f32 0.0, %v558
          %v560 = vpop.f32.mrf.mxu0
          %v561 = vadd.f32 0.0, %v560
          %562 = vmatmul.bf16.gmra.mxu0 %v478
          %v563 = vpop.f32.mrf.mxu0
          %v564 = vadd.f32 0.0, %v563
          %v565 = vpop.f32.mrf.mxu0
          %v566 = vadd.f32 0.0, %v565
          %567 = vmatmul.bf16.gmra.mxu0 %v479
          %v568 = vpop.f32.mrf.mxu0
          %v569 = vadd.f32 0.0, %v568
          %v570 = vpop.f32.mrf.mxu0
          %v571 = vadd.f32 0.0, %v570
          %572 = vmatmul.bf16.gmra.mxu0 %v480
          %v573 = vpop.f32.mrf.mxu0
          %v574 = vadd.f32 0.0, %v573
          %v575 = vpop.f32.mrf.mxu0
          %v576 = vadd.f32 0.0, %v575
          %577 = vmatmul.bf16.gmra.mxu0 %v481
          %v578 = vpop.f32.mrf.mxu0
          %v579 = vadd.f32 0.0, %v578
          %v580 = vpop.f32.mrf.mxu0
          %v581 = vadd.f32 0.0, %v580
          %582 = vmatmul.bf16.gmra.mxu0 %v482
          %v583 = vpop.f32.mrf.mxu0
          %v584 = vadd.f32 0.0, %v583
          %v585 = vpop.f32.mrf.mxu0
          %v586 = vadd.f32 0.0, %v585
          %587 = vdwg.mxu0
          %588 = vst [vmem:[#allocation3] sm:$0xff] %v549
          %589 = vst [vmem:[#allocation3 + $0x8] sm:$0xff] %v551
          %590 = vst [vmem:[#allocation3 + $0x10] sm:$0xff] %v554
          %591 = vst [vmem:[#allocation3 + $0x18] sm:$0xff] %v556
          %592 = vst [vmem:[#allocation3 + $0x20] sm:$0xff] %v559
          %593 = vst [vmem:[#allocation3 + $0x28] sm:$0xff] %v561
          %594 = vst [vmem:[#allocation3 + $0x30] sm:$0xff] %v564
          %595 = vst [vmem:[#allocation3 + $0x38] sm:$0xff] %v566
          %596 = vst [vmem:[#allocation3 + $0x40] sm:$0xff] %v569
          %597 = vst [vmem:[#allocation3 + $0x48] sm:$0xff] %v571
          %598 = vst [vmem:[#allocation3 + $0x50] sm:$0xff] %v574
          %599 = vst [vmem:[#allocation3 + $0x58] sm:$0xff] %v576
          %600 = vst [vmem:[#allocation3 + $0x60] sm:$0xff] %v579
          %601 = vst [vmem:[#allocation3 + $0x68] sm:$0xff] %v581
          %602 = vst [vmem:[#allocation3 + $0x70] sm:$0xff] %v584
          %603 = vst [vmem:[#allocation3 + $0x78] sm:$0xff] %v586
        $region68: #{tpu_custom_call.1} parent=43 // pred_fallthru
          _
        %v604 = vld [vmem:[#allocation2] sm:$0xff]
        %v605 = vld [vmem:[#allocation2 + $0x8] sm:$0xff]
        %v606 = vld [vmem:[#allocation2 + $0x10] sm:$0xff]
        %v607 = vld [vmem:[#allocation2 + $0x18] sm:$0xff]
        %v608 = vld [vmem:[#allocation2 + $0x20] sm:$0xff]
        %v609 = vld [vmem:[#allocation2 + $0x28] sm:$0xff]
        %v610 = vld [vmem:[#allocation2 + $0x30] sm:$0xff]
        %v611 = vld [vmem:[#allocation2 + $0x38] sm:$0xff]
        %v612 = vld [vmem:[#allocation2 + $0x40] sm:$0xff]
        %v613 = vld [vmem:[#allocation2 + $0x48] sm:$0xff]
        %v614 = vld [vmem:[#allocation2 + $0x50] sm:$0xff]
        %v615 = vld [vmem:[#allocation2 + $0x58] sm:$0xff]
        %v616 = vld [vmem:[#allocation2 + $0x60] sm:$0xff]
        %v617 = vld [vmem:[#allocation2 + $0x68] sm:$0xff]
        %v618 = vld [vmem:[#allocation2 + $0x70] sm:$0xff]
        %v619 = vld [vmem:[#allocation2 + $0x78] sm:$0xff]
        %v620 = vld [vmem:[%s326] sm:$0xff]
        %v621 = vld [vmem:[%s326 + $0x8] sm:$0xff]
        %v622 = vld [vmem:[%s326 + $0x10] sm:$0xff]
        %v623 = vld [vmem:[%s326 + $0x18] sm:$0xff]
        %v624 = vld [vmem:[%s326 + $0x20] sm:$0xff]
        %v625 = vld [vmem:[%s326 + $0x28] sm:$0xff]
        %v626 = vld [vmem:[%s326 + $0x30] sm:$0xff]
        %v627 = vld [vmem:[%s326 + $0x38] sm:$0xff]
        %v628 = vld [vmem:[%s326 + $0x40] sm:$0xff]
        %v629 = vld [vmem:[%s326 + $0x48] sm:$0xff]
        %v630 = vld [vmem:[%s326 + $0x50] sm:$0xff]
        %v631 = vld [vmem:[%s326 + $0x58] sm:$0xff]
        %v632 = vld [vmem:[%s326 + $0x60] sm:$0xff]
        %v633 = vld [vmem:[%s326 + $0x68] sm:$0xff]
        %v634 = vld [vmem:[%s326 + $0x70] sm:$0xff]
        %v635 = vld [vmem:[%s326 + $0x78] sm:$0xff]
        %v636 = vld [vmem:[#allocation7] sm:$0xf]
        %v637 = vld [vmem:[#allocation7 + $0x4] sm:$0xf]
        %v638 = vld [vmem:[#allocation7 + $0x8] sm:$0xf]
        %v639 = vld [vmem:[#allocation7 + $0xc] sm:$0xf]
        %v640 = vld [vmem:[#allocation7 + $0x10] sm:$0xf]
        %v641 = vld [vmem:[#allocation7 + $0x14] sm:$0xf]
        %v642 = vld [vmem:[#allocation7 + $0x18] sm:$0xf]
        %v643 = vld [vmem:[#allocation7 + $0x1c] sm:$0xf]
        %v644 = vld [vmem:[#allocation7 + $0x20] sm:$0xf]
        %v645 = vld [vmem:[#allocation7 + $0x24] sm:$0xf]
        %v646 = vld [vmem:[#allocation7 + $0x28] sm:$0xf]
        %v647 = vld [vmem:[#allocation7 + $0x2c] sm:$0xf]
        %v648 = vld [vmem:[#allocation7 + $0x30] sm:$0xf]
        %v649 = vld [vmem:[#allocation7 + $0x34] sm:$0xf]
        %v650 = vld [vmem:[#allocation7 + $0x38] sm:$0xf]
        %v651 = vld [vmem:[#allocation7 + $0x3c] sm:$0xf]
        %v652 = vld [vmem:[#allocation7 + $0x40] sm:$0xf]
        %v653 = vld [vmem:[#allocation7 + $0x44] sm:$0xf]
        %v654 = vld [vmem:[#allocation7 + $0x48] sm:$0xf]
        %v655 = vld [vmem:[#allocation7 + $0x4c] sm:$0xf]
        %v656 = vld [vmem:[#allocation7 + $0x50] sm:$0xf]
        %v657 = vld [vmem:[#allocation7 + $0x54] sm:$0xf]
        %v658 = vld [vmem:[#allocation7 + $0x58] sm:$0xf]
        %v659 = vld [vmem:[#allocation7 + $0x5c] sm:$0xf]
        %v660 = vld [vmem:[#allocation7 + $0x60] sm:$0xf]
        %v661 = vld [vmem:[#allocation7 + $0x64] sm:$0xf]
        %v662 = vld [vmem:[#allocation7 + $0x68] sm:$0xf]
        %v663 = vld [vmem:[#allocation7 + $0x6c] sm:$0xf]
        %v664 = vld [vmem:[#allocation7 + $0x70] sm:$0xf]
        %v665 = vld [vmem:[#allocation7 + $0x74] sm:$0xf]
        %v666 = vld [vmem:[#allocation7 + $0x78] sm:$0xf]
        %v667 = vld [vmem:[#allocation7 + $0x7c] sm:$0xf]
        %v684 = vunpack.c.l.b16 %v620
        %v685 = vunpack.c.h.b16 %v620
        %v686 = vunpack.c.l.b16 %v621
        %v687 = vunpack.c.h.b16 %v621
        %v688 = vunpack.c.l.b16 %v622
        %v689 = vunpack.c.h.b16 %v622
        %v690 = vunpack.c.l.b16 %v623
        %v691 = vunpack.c.h.b16 %v623
        %v692 = vunpack.c.l.b16 %v624
        %v693 = vunpack.c.h.b16 %v624
        %v694 = vunpack.c.l.b16 %v625
        %v695 = vunpack.c.h.b16 %v625
        %v696 = vunpack.c.l.b16 %v626
        %v697 = vunpack.c.h.b16 %v626
        %v698 = vunpack.c.l.b16 %v627
        %v699 = vunpack.c.h.b16 %v627
        %v700 = vunpack.c.l.b16 %v628
        %v701 = vunpack.c.h.b16 %v628
        %v702 = vunpack.c.l.b16 %v629
        %v703 = vunpack.c.h.b16 %v629
        %v704 = vunpack.c.l.b16 %v630
        %v705 = vunpack.c.h.b16 %v630
        %v706 = vunpack.c.l.b16 %v631
        %v707 = vunpack.c.h.b16 %v631
        %v708 = vunpack.c.l.b16 %v632
        %v709 = vunpack.c.h.b16 %v632
        %v710 = vunpack.c.l.b16 %v633
        %v711 = vunpack.c.h.b16 %v633
        %v712 = vunpack.c.l.b16 %v634
        %v713 = vunpack.c.h.b16 %v634
        %v714 = vunpack.c.l.b16 %v635
        %v715 = vunpack.c.h.b16 %v635
        %v716 = vpack.c.b16 %v686, %v684
        %v717 = vpack.c.b16 %v687, %v685
        %v718 = vpack.c.b16 %v690, %v688
        %v719 = vpack.c.b16 %v691, %v689
        %v720 = vpack.c.b16 %v694, %v692
        %v721 = vpack.c.b16 %v695, %v693
        %v722 = vpack.c.b16 %v698, %v696
        %v723 = vpack.c.b16 %v699, %v697
        %v724 = vpack.c.b16 %v702, %v700
        %v725 = vpack.c.b16 %v703, %v701
        %v726 = vpack.c.b16 %v706, %v704
        %v727 = vpack.c.b16 %v707, %v705
        %v728 = vpack.c.b16 %v710, %v708
        %v729 = vpack.c.b16 %v711, %v709
        %v730 = vpack.c.b16 %v714, %v712
        %v731 = vpack.c.b16 %v715, %v713
        %v780 = vunpack.c.l.b16 %v636
        %v781 = vunpack.c.l.b16 %v637
        %v782 = vunpack.c.l.b16 %v638
        %v783 = vunpack.c.l.b16 %v639
        %v784 = vunpack.c.l.b16 %v640
        %v785 = vunpack.c.l.b16 %v641
        %v786 = vunpack.c.l.b16 %v642
        %v787 = vunpack.c.l.b16 %v643
        %v788 = vunpack.c.l.b16 %v644
        %v789 = vunpack.c.l.b16 %v645
        %v790 = vunpack.c.l.b16 %v646
        %v791 = vunpack.c.l.b16 %v647
        %v792 = vunpack.c.l.b16 %v648
        %v793 = vunpack.c.l.b16 %v649
        %v794 = vunpack.c.l.b16 %v650
        %v795 = vunpack.c.l.b16 %v651
        %v796 = vunpack.c.l.b16 %v652
        %v797 = vunpack.c.l.b16 %v653
        %v798 = vunpack.c.l.b16 %v654
        %v799 = vunpack.c.l.b16 %v655
        %v800 = vunpack.c.l.b16 %v656
        %v801 = vunpack.c.l.b16 %v657
        %v802 = vunpack.c.l.b16 %v658
        %v803 = vunpack.c.l.b16 %v659
        %v804 = vunpack.c.l.b16 %v660
        %v805 = vunpack.c.l.b16 %v661
        %v806 = vunpack.c.l.b16 %v662
        %v807 = vunpack.c.l.b16 %v663
        %v808 = vunpack.c.l.b16 %v664
        %v809 = vunpack.c.l.b16 %v665
        %v810 = vunpack.c.l.b16 %v666
        %v811 = vunpack.c.l.b16 %v667
        %v812 = vpack.c.b16 %v781, %v780
        %v813 = vpack.c.b16 %v783, %v782
        %v814 = vpack.c.b16 %v785, %v784
        %v815 = vpack.c.b16 %v787, %v786
        %v816 = vpack.c.b16 %v789, %v788
        %v817 = vpack.c.b16 %v791, %v790
        %v818 = vpack.c.b16 %v793, %v792
        %v819 = vpack.c.b16 %v795, %v794
        %v820 = vpack.c.b16 %v797, %v796
        %v821 = vpack.c.b16 %v799, %v798
        %v822 = vpack.c.b16 %v801, %v800
        %v823 = vpack.c.b16 %v803, %v802
        %v824 = vpack.c.b16 %v805, %v804
        %v825 = vpack.c.b16 %v807, %v806
        %v826 = vpack.c.b16 %v809, %v808
        %v827 = vpack.c.b16 %v811, %v810
        %844 = vmatpush.bf16.msra.mxu0 %v819
        %845 = vmatpush.bf16.msra.mxu0 %v818
        %846 = vmatpush.bf16.msra.mxu0 %v817
        %847 = vmatpush.bf16.msra.mxu0 %v816
        %848 = vmatpush.bf16.msra.mxu0 %v815
        %849 = vmatpush.bf16.msra.mxu0 %v814
        %850 = vmatpush.bf16.msra.mxu0 %v813
        %851 = vmatpush.bf16.msra.mxu0 %v812
        %852 = vmatmul.bf16.gmra.mxu0 %v716
        %v853 = vpop.f32.mrf.mxu0
        %v854 = vadd.f32 0.0, %v853
        %v855 = vpop.f32.mrf.mxu0
        %v856 = vadd.f32 0.0, %v855
        %857 = vmatmul.bf16.gmra.mxu0 %v718
        %v858 = vpop.f32.mrf.mxu0
        %v859 = vadd.f32 0.0, %v858
        %v860 = vpop.f32.mrf.mxu0
        %v861 = vadd.f32 0.0, %v860
        %862 = vmatmul.bf16.gmra.mxu0 %v720
        %v863 = vpop.f32.mrf.mxu0
        %v864 = vadd.f32 0.0, %v863
        %v865 = vpop.f32.mrf.mxu0
        %v866 = vadd.f32 0.0, %v865
        %867 = vmatmul.bf16.gmra.mxu0 %v722
        %v868 = vpop.f32.mrf.mxu0
        %v869 = vadd.f32 0.0, %v868
        %v870 = vpop.f32.mrf.mxu0
        %v871 = vadd.f32 0.0, %v870
        %872 = vmatmul.bf16.gmra.mxu0 %v724
        %v873 = vpop.f32.mrf.mxu0
        %v874 = vadd.f32 0.0, %v873
        %v875 = vpop.f32.mrf.mxu0
        %v876 = vadd.f32 0.0, %v875
        %877 = vmatmul.bf16.gmra.mxu0 %v726
        %v878 = vpop.f32.mrf.mxu0
        %v879 = vadd.f32 0.0, %v878
        %v880 = vpop.f32.mrf.mxu0
        %v881 = vadd.f32 0.0, %v880
        %882 = vmatmul.bf16.gmra.mxu0 %v728
        %v883 = vpop.f32.mrf.mxu0
        %v884 = vadd.f32 0.0, %v883
        %v885 = vpop.f32.mrf.mxu0
        %v886 = vadd.f32 0.0, %v885
        %887 = vmatmul.bf16.gmra.mxu0 %v730
        %v888 = vpop.f32.mrf.mxu0
        %v889 = vadd.f32 0.0, %v888
        %v890 = vpop.f32.mrf.mxu0
        %v891 = vadd.f32 0.0, %v890
        %892 = vdwg.mxu0
        %893 = vmatpush.bf16.msra.mxu0 %v827
        %894 = vmatpush.bf16.msra.mxu0 %v826
        %895 = vmatpush.bf16.msra.mxu0 %v825
        %896 = vmatpush.bf16.msra.mxu0 %v824
        %897 = vmatpush.bf16.msra.mxu0 %v823
        %898 = vmatpush.bf16.msra.mxu0 %v822
        %899 = vmatpush.bf16.msra.mxu0 %v821
        %900 = vmatpush.bf16.msra.mxu0 %v820
        %901 = vmatmul.bf16.gmra.mxu0 %v717
        %v902 = vpop.f32.mrf.mxu0
        %v903 = vadd.f32 %v854, %v902
        %v904 = vpop.f32.mrf.mxu0
        %v905 = vadd.f32 %v856, %v904
        %906 = vmatmul.bf16.gmra.mxu0 %v719
        %v907 = vpop.f32.mrf.mxu0
        %v908 = vadd.f32 %v859, %v907
        %v909 = vpop.f32.mrf.mxu0
        %v910 = vadd.f32 %v861, %v909
        %911 = vmatmul.bf16.gmra.mxu0 %v721
        %v912 = vpop.f32.mrf.mxu0
        %v913 = vadd.f32 %v864, %v912
        %v914 = vpop.f32.mrf.mxu0
        %v915 = vadd.f32 %v866, %v914
        %916 = vmatmul.bf16.gmra.mxu0 %v723
        %v917 = vpop.f32.mrf.mxu0
        %v918 = vadd.f32 %v869, %v917
        %v919 = vpop.f32.mrf.mxu0
        %v920 = vadd.f32 %v871, %v919
        %921 = vmatmul.bf16.gmra.mxu0 %v725
        %v922 = vpop.f32.mrf.mxu0
        %v923 = vadd.f32 %v874, %v922
        %v924 = vpop.f32.mrf.mxu0
        %v925 = vadd.f32 %v876, %v924
        %926 = vmatmul.bf16.gmra.mxu0 %v727
        %v927 = vpop.f32.mrf.mxu0
        %v928 = vadd.f32 %v879, %v927
        %v929 = vpop.f32.mrf.mxu0
        %v930 = vadd.f32 %v881, %v929
        %931 = vmatmul.bf16.gmra.mxu0 %v729
        %v932 = vpop.f32.mrf.mxu0
        %v933 = vadd.f32 %v884, %v932
        %v934 = vpop.f32.mrf.mxu0
        %v935 = vadd.f32 %v886, %v934
        %936 = vmatmul.bf16.gmra.mxu0 %v731
        %v937 = vpop.f32.mrf.mxu0
        %v938 = vadd.f32 %v889, %v937
        %v939 = vpop.f32.mrf.mxu0
        %v940 = vadd.f32 %v891, %v939
        %941 = vdwg.mxu0
        %v942 = vadd.f32 %v604, %v903
        %v943 = vadd.f32 %v605, %v905
        %v944 = vadd.f32 %v606, %v908
        %v945 = vadd.f32 %v607, %v910
        %v946 = vadd.f32 %v608, %v913
        %v947 = vadd.f32 %v609, %v915
        %v948 = vadd.f32 %v610, %v918
        %v949 = vadd.f32 %v611, %v920
        %v950 = vadd.f32 %v612, %v923
        %v951 = vadd.f32 %v613, %v925
        %v952 = vadd.f32 %v614, %v928
        %v953 = vadd.f32 %v615, %v930
        %v954 = vadd.f32 %v616, %v933
        %v955 = vadd.f32 %v617, %v935
        %v956 = vadd.f32 %v618, %v938
        %v957 = vadd.f32 %v619, %v940
        %958 = vst [vmem:[#allocation2] sm:$0xff] %v942
        %959 = vst [vmem:[#allocation2 + $0x8] sm:$0xff] %v943
        %960 = vst [vmem:[#allocation2 + $0x10] sm:$0xff] %v944
        %961 = vst [vmem:[#allocation2 + $0x18] sm:$0xff] %v945
        %962 = vst [vmem:[#allocation2 + $0x20] sm:$0xff] %v946
        %963 = vst [vmem:[#allocation2 + $0x28] sm:$0xff] %v947
        %964 = vst [vmem:[#allocation2 + $0x30] sm:$0xff] %v948
        %965 = vst [vmem:[#allocation2 + $0x38] sm:$0xff] %v949
        %966 = vst [vmem:[#allocation2 + $0x40] sm:$0xff] %v950
        %967 = vst [vmem:[#allocation2 + $0x48] sm:$0xff] %v951
        %968 = vst [vmem:[#allocation2 + $0x50] sm:$0xff] %v952
        %969 = vst [vmem:[#allocation2 + $0x58] sm:$0xff] %v953
        %970 = vst [vmem:[#allocation2 + $0x60] sm:$0xff] %v954
        %971 = vst [vmem:[#allocation2 + $0x68] sm:$0xff] %v955
        %972 = vst [vmem:[#allocation2 + $0x70] sm:$0xff] %v956
        %973 = vst [vmem:[#allocation2 + $0x78] sm:$0xff] %v957
        // Predicated region
        $region69: #{tpu_custom_call.1} parent=43 // pred_check
          %p974 = pneg %p391
        $region70: #{tpu_custom_call.1} parent=43 // pred_check_branch
          %976 = sbr.rel (%p974) target = $region72
        $region71: #{tpu_custom_call.1} parent=43 // pred_region
          %v977 = vld [vmem:[#allocation3] sm:$0xff]
          %v978 = vld [vmem:[#allocation3 + $0x8] sm:$0xff]
          %v979 = vld [vmem:[#allocation3 + $0x10] sm:$0xff]
          %v980 = vld [vmem:[#allocation3 + $0x18] sm:$0xff]
          %v981 = vld [vmem:[#allocation3 + $0x20] sm:$0xff]
          %v982 = vld [vmem:[#allocation3 + $0x28] sm:$0xff]
          %v983 = vld [vmem:[#allocation3 + $0x30] sm:$0xff]
          %v984 = vld [vmem:[#allocation3 + $0x38] sm:$0xff]
          %v985 = vld [vmem:[#allocation3 + $0x40] sm:$0xff]
          %v986 = vld [vmem:[#allocation3 + $0x48] sm:$0xff]
          %v987 = vld [vmem:[#allocation3 + $0x50] sm:$0xff]
          %v988 = vld [vmem:[#allocation3 + $0x58] sm:$0xff]
          %v989 = vld [vmem:[#allocation3 + $0x60] sm:$0xff]
          %v990 = vld [vmem:[#allocation3 + $0x68] sm:$0xff]
          %v991 = vld [vmem:[#allocation3 + $0x70] sm:$0xff]
          %v992 = vld [vmem:[#allocation3 + $0x78] sm:$0xff]
          %v993 = vld [vmem:[#allocation2] sm:$0xff]
          %v994 = vld [vmem:[#allocation2 + $0x8] sm:$0xff]
          %v995 = vld [vmem:[#allocation2 + $0x10] sm:$0xff]
          %v996 = vld [vmem:[#allocation2 + $0x18] sm:$0xff]
          %v997 = vld [vmem:[#allocation2 + $0x20] sm:$0xff]
          %v998 = vld [vmem:[#allocation2 + $0x28] sm:$0xff]
          %v999 = vld [vmem:[#allocation2 + $0x30] sm:$0xff]
          %v1000 = vld [vmem:[#allocation2 + $0x38] sm:$0xff]
          %v1001 = vld [vmem:[#allocation2 + $0x40] sm:$0xff]
          %v1002 = vld [vmem:[#allocation2 + $0x48] sm:$0xff]
          %v1003 = vld [vmem:[#allocation2 + $0x50] sm:$0xff]
          %v1004 = vld [vmem:[#allocation2 + $0x58] sm:$0xff]
          %v1005 = vld [vmem:[#allocation2 + $0x60] sm:$0xff]
          %v1006 = vld [vmem:[#allocation2 + $0x68] sm:$0xff]
          %v1007 = vld [vmem:[#allocation2 + $0x70] sm:$0xff]
          %v1008 = vld [vmem:[#allocation2 + $0x78] sm:$0xff]
          %v1009 = vpack.c.bf16 %v994, %v993
          %v1010 = vpack.c.bf16 %v996, %v995
          %v1011 = vpack.c.bf16 %v998, %v997
          %v1012 = vpack.c.bf16 %v1000, %v999
          %v1013 = vpack.c.bf16 %v1002, %v1001
          %v1014 = vpack.c.bf16 %v1004, %v1003
          %v1015 = vpack.c.bf16 %v1006, %v1005
          %v1016 = vpack.c.bf16 %v1008, %v1007
          %v1017 = vld [vmem:[#allocation11] sm:$0xf]
          %v1018 = vld [vmem:[#allocation11 + $0x4] sm:$0xf]
          %v1019 = vld [vmem:[#allocation11 + $0x8] sm:$0xf]
          %v1020 = vld [vmem:[#allocation11 + $0xc] sm:$0xf]
          %v1021 = vld [vmem:[#allocation11 + $0x10] sm:$0xf]
          %v1022 = vld [vmem:[#allocation11 + $0x14] sm:$0xf]
          %v1023 = vld [vmem:[#allocation11 + $0x18] sm:$0xf]
          %v1024 = vld [vmem:[#allocation11 + $0x1c] sm:$0xf]
          %v1025 = vld [vmem:[#allocation11 + $0x20] sm:$0xf]
          %v1026 = vld [vmem:[#allocation11 + $0x24] sm:$0xf]
          %v1027 = vld [vmem:[#allocation11 + $0x28] sm:$0xf]
          %v1028 = vld [vmem:[#allocation11 + $0x2c] sm:$0xf]
          %v1029 = vld [vmem:[#allocation11 + $0x30] sm:$0xf]
          %v1030 = vld [vmem:[#allocation11 + $0x34] sm:$0xf]
          %v1031 = vld [vmem:[#allocation11 + $0x38] sm:$0xf]
          %v1032 = vld [vmem:[#allocation11 + $0x3c] sm:$0xf]
          %v1049 = vunpack.c.l.b16 %v1017
          %v1050 = vunpack.c.l.b16 %v1018
          %v1051 = vunpack.c.l.b16 %v1019
          %v1052 = vunpack.c.l.b16 %v1020
          %v1053 = vunpack.c.l.b16 %v1021
          %v1054 = vunpack.c.l.b16 %v1022
          %v1055 = vunpack.c.l.b16 %v1023
          %v1056 = vunpack.c.l.b16 %v1024
          %v1057 = vunpack.c.l.b16 %v1025
          %v1058 = vunpack.c.l.b16 %v1026
          %v1059 = vunpack.c.l.b16 %v1027
          %v1060 = vunpack.c.l.b16 %v1028
          %v1061 = vunpack.c.l.b16 %v1029
          %v1062 = vunpack.c.l.b16 %v1030
          %v1063 = vunpack.c.l.b16 %v1031
          %v1064 = vunpack.c.l.b16 %v1032
          %v1065 = vpack.c.b16 %v1050, %v1049
          %v1066 = vpack.c.b16 %v1052, %v1051
          %v1067 = vpack.c.b16 %v1054, %v1053
          %v1068 = vpack.c.b16 %v1056, %v1055
          %v1069 = vpack.c.b16 %v1058, %v1057
          %v1070 = vpack.c.b16 %v1060, %v1059
          %v1071 = vpack.c.b16 %v1062, %v1061
          %v1072 = vpack.c.b16 %v1064, %v1063
          %1081 = vmatpush.bf16.msra.mxu0 %v1072
          %1082 = vmatpush.bf16.msra.mxu0 %v1071
          %1083 = vmatpush.bf16.msra.mxu0 %v1070
          %1084 = vmatpush.bf16.msra.mxu0 %v1069
          %1085 = vmatpush.bf16.msra.mxu0 %v1068
          %1086 = vmatpush.bf16.msra.mxu0 %v1067
          %1087 = vmatpush.bf16.msra.mxu0 %v1066
          %1088 = vmatpush.bf16.msra.mxu0 %v1065
          %1089 = vmatmul.bf16.gmra.mxu0 %v1009
          %v1090 = vpop.f32.mrf.mxu0
          %v1091 = vadd.f32 0.0, %v1090
          %v1092 = vpop.f32.mrf.mxu0
          %v1093 = vadd.f32 0.0, %v1092
          %1094 = vmatmul.bf16.gmra.mxu0 %v1010
          %v1095 = vpop.f32.mrf.mxu0
          %v1096 = vadd.f32 0.0, %v1095
          %v1097 = vpop.f32.mrf.mxu0
          %v1098 = vadd.f32 0.0, %v1097
          %1099 = vmatmul.bf16.gmra.mxu0 %v1011
          %v1100 = vpop.f32.mrf.mxu0
          %v1101 = vadd.f32 0.0, %v1100
          %v1102 = vpop.f32.mrf.mxu0
          %v1103 = vadd.f32 0.0, %v1102
          %1104 = vmatmul.bf16.gmra.mxu0 %v1012
          %v1105 = vpop.f32.mrf.mxu0
          %v1106 = vadd.f32 0.0, %v1105
          %v1107 = vpop.f32.mrf.mxu0
          %v1108 = vadd.f32 0.0, %v1107
          %1109 = vmatmul.bf16.gmra.mxu0 %v1013
          %v1110 = vpop.f32.mrf.mxu0
          %v1111 = vadd.f32 0.0, %v1110
          %v1112 = vpop.f32.mrf.mxu0
          %v1113 = vadd.f32 0.0, %v1112
          %1114 = vmatmul.bf16.gmra.mxu0 %v1014
          %v1115 = vpop.f32.mrf.mxu0
          %v1116 = vadd.f32 0.0, %v1115
          %v1117 = vpop.f32.mrf.mxu0
          %v1118 = vadd.f32 0.0, %v1117
          %1119 = vmatmul.bf16.gmra.mxu0 %v1015
          %v1120 = vpop.f32.mrf.mxu0
          %v1121 = vadd.f32 0.0, %v1120
          %v1122 = vpop.f32.mrf.mxu0
          %v1123 = vadd.f32 0.0, %v1122
          %1124 = vmatmul.bf16.gmra.mxu0 %v1016
          %v1125 = vpop.f32.mrf.mxu0
          %v1126 = vadd.f32 0.0, %v1125
          %v1127 = vpop.f32.mrf.mxu0
          %v1128 = vadd.f32 0.0, %v1127
          %1129 = vdwg.mxu0
          %v1130 = vadd.f32 %v977, %v1091
          %v1131 = vadd.f32 %v978, %v1093
          %v1132 = vadd.f32 %v979, %v1096
          %v1133 = vadd.f32 %v980, %v1098
          %v1134 = vadd.f32 %v981, %v1101
          %v1135 = vadd.f32 %v982, %v1103
          %v1136 = vadd.f32 %v983, %v1106
          %v1137 = vadd.f32 %v984, %v1108
          %v1138 = vadd.f32 %v985, %v1111
          %v1139 = vadd.f32 %v986, %v1113
          %v1140 = vadd.f32 %v987, %v1116
          %v1141 = vadd.f32 %v988, %v1118
          %v1142 = vadd.f32 %v989, %v1121
          %v1143 = vadd.f32 %v990, %v1123
          %v1144 = vadd.f32 %v991, %v1126
          %v1145 = vadd.f32 %v992, %v1128
          %v1146 = vld [vmem:[%s5] sm:$0x1]
          %v1148 = vperm.slane %v1146, 0
          %v1150 = vadd.f32 %v1130, %v1148
          %v1151 = vadd.f32 %v1131, %v1148
          %v1152 = vadd.f32 %v1132, %v1148
          %v1153 = vadd.f32 %v1133, %v1148
          %v1154 = vadd.f32 %v1134, %v1148
          %v1155 = vadd.f32 %v1135, %v1148
          %v1156 = vadd.f32 %v1136, %v1148
          %v1157 = vadd.f32 %v1137, %v1148
          %v1158 = vadd.f32 %v1138, %v1148
          %v1159 = vadd.f32 %v1139, %v1148
          %v1160 = vadd.f32 %v1140, %v1148
          %v1161 = vadd.f32 %v1141, %v1148
          %v1162 = vadd.f32 %v1142, %v1148
          %v1163 = vadd.f32 %v1143, %v1148
          %v1164 = vadd.f32 %v1144, %v1148
          %v1165 = vadd.f32 %v1145, %v1148
          %v1166 = vmax.f32 %v1150, 0.0
          %v1167 = vmax.f32 %v1151, 0.0
          %v1168 = vmax.f32 %v1152, 0.0
          %v1169 = vmax.f32 %v1153, 0.0
          %v1170 = vmax.f32 %v1154, 0.0
          %v1171 = vmax.f32 %v1155, 0.0
          %v1172 = vmax.f32 %v1156, 0.0
          %v1173 = vmax.f32 %v1157, 0.0
          %v1174 = vmax.f32 %v1158, 0.0
          %v1175 = vmax.f32 %v1159, 0.0
          %v1176 = vmax.f32 %v1160, 0.0
          %v1177 = vmax.f32 %v1161, 0.0
          %v1178 = vmax.f32 %v1162, 0.0
          %v1179 = vmax.f32 %v1163, 0.0
          %v1180 = vmax.f32 %v1164, 0.0
          %v1181 = vmax.f32 %v1165, 0.0
          %v1182 = vpack.c.bf16 %v1166, %v1166
          %v1183 = vpack.c.bf16 %v1167, %v1167
          %v1184 = vpack.c.bf16 %v1168, %v1168
          %v1185 = vpack.c.bf16 %v1169, %v1169
          %v1186 = vpack.c.bf16 %v1170, %v1170
          %v1187 = vpack.c.bf16 %v1171, %v1171
          %v1188 = vpack.c.bf16 %v1172, %v1172
          %v1189 = vpack.c.bf16 %v1173, %v1173
          %v1190 = vpack.c.bf16 %v1174, %v1174
          %v1191 = vpack.c.bf16 %v1175, %v1175
          %v1192 = vpack.c.bf16 %v1176, %v1176
          %v1193 = vpack.c.bf16 %v1177, %v1177
          %v1194 = vpack.c.bf16 %v1178, %v1178
          %v1195 = vpack.c.bf16 %v1179, %v1179
          %v1196 = vpack.c.bf16 %v1180, %v1180
          %v1197 = vpack.c.bf16 %v1181, %v1181
          %1198 = vst [vmem:[%s385] sm:$0xf] %v1182
          %1199 = vst [vmem:[%s385 + $0x4] sm:$0xf] %v1183
          %1200 = vst [vmem:[%s385 + $0x8] sm:$0xf] %v1184
          %1201 = vst [vmem:[%s385 + $0xc] sm:$0xf] %v1185
          %1202 = vst [vmem:[%s385 + $0x10] sm:$0xf] %v1186
          %1203 = vst [vmem:[%s385 + $0x14] sm:$0xf] %v1187
          %1204 = vst [vmem:[%s385 + $0x18] sm:$0xf] %v1188
          %1205 = vst [vmem:[%s385 + $0x1c] sm:$0xf] %v1189
          %1206 = vst [vmem:[%s385 + $0x20] sm:$0xf] %v1190
          %1207 = vst [vmem:[%s385 + $0x24] sm:$0xf] %v1191
          %1208 = vst [vmem:[%s385 + $0x28] sm:$0xf] %v1192
          %1209 = vst [vmem:[%s385 + $0x2c] sm:$0xf] %v1193
          %1210 = vst [vmem:[%s385 + $0x30] sm:$0xf] %v1194
          %1211 = vst [vmem:[%s385 + $0x34] sm:$0xf] %v1195
          %1212 = vst [vmem:[%s385 + $0x38] sm:$0xf] %v1196
          %1213 = vst [vmem:[%s385 + $0x3c] sm:$0xf] %v1197
        $region72: #{tpu_custom_call.1} parent=43 // pred_fallthru
          _
        %s1214 = sand.u32 %s188, 1
        %s1215 = scalar_lea.sflag [#allocation6], %s1214
        %s1216 = sand.u32 %s188, 1
        %s1217 = smul.addr %s1216, 64
        %s1218 = scalar_lea.vmem [#allocation13], %s1217
        // Predicated region
        $region73: #{tpu_custom_call.1} parent=43 // pred_check
          %p1219 = pneg %p198
        $region74: #{tpu_custom_call.1} parent=43 // pred_check_branch
          %1221 = sbr.rel (%p1219) target = $region76
        $region75: #{tpu_custom_call.1} parent=43 // pred_region
          %s1222 = smul.u32 16, %s29
          %1224 = vsyncadd %s1215, 0
          %s1225 = smul.addr %s1222, 4
          %s1226 = scalar_lea.hbm %s6, %s1225
          %s1227 = sshll.u32 %s1218, 4
          %s1228 = int_to_ptr.vmem [resolvable:$true] %s1227
          %s1229 = sshll.u32 %s1226, 4
          %s1230 = int_to_ptr.hbm [resolvable:$true] %s1229
          %1235 = dma.vmem_to_hbm [thread:$0]  %s1228, 1024, %s1230, %s1215, 64, 64, 4
        $region76: #{tpu_custom_call.1} parent=43 // pred_fallthru
          _
      $region44: #{tpu_custom_call.1} parent=5 // pred_fallthru
        _
      %p1236 = scmp.le.s32.totalorder 2, %s20
      // Predicated region
      $region77: #{tpu_custom_call.1} parent=5 // pred_check
        %p1237 = pneg %p1236
      $region78: #{tpu_custom_call.1} parent=5 // pred_check_branch
        %1239 = sbr.rel (%p1237) target = $region80
      $region79: #{tpu_custom_call.1} parent=5 // pred_region
        %s1240 = ssub.s32 %s20, 2
        // Predicated region
        $region81: #{tpu_custom_call.1} parent=79 // pred_check
          %p1241 = pneg %p204
        $region82: #{tpu_custom_call.1} parent=79 // pred_check_branch
          %1243 = sbr.rel (%p1241) target = $region84
        $region83: #{tpu_custom_call.1} parent=79 // pred_region
          %s1244 = sand.u32 %s189, 1
          %s1245 = scalar_lea.sflag [#allocation6], %s1244
          %s1246 = sand.u32 %s189, 1
          %s1247 = smul.addr %s1246, 64
          %s1248 = scalar_lea.vmem [#allocation13], %s1247
          %1250 = dma.done %s1245, 1024
        $region84: #{tpu_custom_call.1} parent=79 // pred_fallthru
          _
      $region80: #{tpu_custom_call.1} parent=5 // pred_fallthru
        _
    $region6: #{tpu_custom_call.1} parent=1 // loop_footer
      %s24 = sadd.s32 1, %s20
    $region7: #{tpu_custom_call.1} parent=1 // loop_footer_branch
      %19 = sbr.rel target = $region3
    $region8: #{tpu_custom_call.1} parent=1 // loop_exit
      _
    %1251 = vsyncpa [#allocation5], 1
    %s1252 = scalar_lea.sflag [#allocation5], 1
    %1253 = vsyncpa %s1252, 1
    %1254 = vsyncpa [#allocation8], 1
    %1255 = vsyncpa [#allocation12], 1
    %1256 = vsyncpa [#allocation6], 1
    %s1257 = scalar_lea.sflag [#allocation6], 1
    %1258 = vsyncpa %s1257, 1

</llo_original>
